<compile_context>
chip_gen: v7x
topology: tpu7x:2x2x1
jax: 0.10.0
libtpu: 0.0.40
codegen_flags: <defaults>
</compile_context>

<pallas_src>
import jax
import jax.numpy as jnp
from jax import lax
from jax.experimental import pallas as pl
from jax.experimental.pallas import tpu as pltpu


# ----------------------------- Pallas kernel --------------------------------

def _embed_kernel(ids_ref, emb_ref, pos_ref, out_ref):
    """Fused token-embedding gather + positional add for one (batch, seq-tile).

    ids_ref : SMEM [B*S] int32   (scalar-prefetched token ids, flattened)
    emb_ref : VMEM [V, D] f32    (embedding table, resident across the grid)
    pos_ref : VMEM [TS, D] f32   (positional-encoding tile t)
    out_ref : VMEM [TS, D] f32   (output tile; batch dim squeezed by BlockSpec)
    """
    b = pl.program_id(0)
    t = pl.program_id(1)
    ts = out_ref.shape[0]
    seq = pl.num_programs(1) * ts
    base = b * seq + t * ts

    def body(s, carry):
        tok = ids_ref[base + s]
        # In-VMEM row gather fused with the positional add, stored straight
        # into the output block (no scratch tile, no HBM round-trip).
        out_ref[pl.ds(s, 1), :] = (
            emb_ref[pl.ds(tok, 1), :] + pos_ref[pl.ds(s, 1), :]
        )
        return carry

    lax.fori_loop(0, ts, body, 0, unroll=min(ts, 8))


# ----------------------------- wrapper ---------------------------------------

def transformer_embedding(ids, emb_table, pos_enc, *, seq_tile=None):
    """TransformerEmbedding.forward: emb_table[ids] + pos_enc[:S] (dropout=id)."""
    B, S = ids.shape
    V, D = emb_table.shape
    assert pos_enc.shape[0] >= S and pos_enc.shape[1] == D

    if seq_tile is None:
        # Largest (8-multiple) tile that divides S; full extent as fallback.
        seq_tile = S
        for cand in (2048, 1024, 512, 256, 128, 64, 32, 16, 8):
            if cand <= S and S % cand == 0:
                seq_tile = cand
                break
    assert S % seq_tile == 0

    pos_slice = pos_enc[:S].astype(jnp.float32)                 # [S, D]
    ids_flat = jnp.clip(ids.astype(jnp.int32), 0, V - 1).reshape(-1)  # 1-D SMEM

    # VMEM budget: resident table + (double-buffered) pos tile + out tile.
    f32 = jnp.dtype(jnp.float32).itemsize
    table_bytes = V * D * f32
    needed = 2 * table_bytes + 4 * seq_tile * D * f32 + (1 << 20)
    vmem_limit = int(min(64 * 1024 * 1024, max(32 * 1024 * 1024, needed)))
    assert table_bytes <= vmem_limit - (4 << 20), (
        "embedding table too large for the VMEM-resident path")

    grid_spec = pltpu.PrefetchScalarGridSpec(
        num_scalar_prefetch=1,                     # ids -> SMEM
        grid=(B, S // seq_tile),
        in_specs=[
            # Embedding table: constant index_map -> DMA'd once, stays resident.
            pl.BlockSpec((V, D), lambda b, t, ids_s: (0, 0)),
            # Positional encoding tile for this sequence tile.
            pl.BlockSpec((seq_tile, D), lambda b, t, ids_s: (t, 0)),
        ],
        # Batch dim squeezed (None) so the kernel sees a lane-dense (TS, D) tile.
        out_specs=pl.BlockSpec((None, seq_tile, D), lambda b, t, ids_s: (b, t, 0)),
    )
    return pl.pallas_call(
        _embed_kernel,
        out_shape=jax.ShapeDtypeStruct((B, S, D), jnp.float32),
        grid_spec=grid_spec,
        compiler_params=pltpu.CompilerParams(
            dimension_semantics=("parallel", "parallel"),
            vmem_limit_bytes=vmem_limit),
    )(ids_flat, emb_table.astype(jnp.float32), pos_slice)


# ----------------------------- param helpers ---------------------------------

def positional_encoding(max_len, d_model):
    """Matches PositionalEncoding.__init__ (sin on even cols, cos on odd)."""
    pos = jnp.arange(max_len, dtype=jnp.float32)[:, None]
    two_i = jnp.arange(0, d_model, 2, dtype=jnp.float32)
    angle = pos / (10000.0 ** (two_i / d_model))
    enc = jnp.zeros((max_len, d_model), jnp.float32)
    enc = enc.at[:, 0::2].set(jnp.sin(angle))
    enc = enc.at[:, 1::2].set(jnp.cos(angle))
    return enc


# --------------------------------- main ---------------------------------------

if __name__ == "__main__":
    B, S = 2, 16
    D_MODEL = 128          # lane-dense d_model (keep last dim a 128-multiple)
    VOCAB = 64
    MAX_LEN = 32

    root = jax.random.PRNGKey(0)
    k_emb, k_ids = jax.random.split(root)

    # nn.Embedding default init: N(0, 1)
    emb_table = jax.random.normal(k_emb, (VOCAB, D_MODEL), jnp.float32)
    pos_enc = positional_encoding(MAX_LEN, D_MODEL)
    ids = jax.random.randint(k_ids, (B, S), 0, VOCAB, dtype=jnp.int32)

    # seq_tile=8 exercises the sequence-tiled grid (grid = (2, 2)) at demo sizes.
    out = transformer_embedding(ids, emb_table, pos_enc, seq_tile=8)
    out = jax.block_until_ready(out)

    # pure-JAX reference (token embedding gather + positional add)
    ref = emb_table[ids] + pos_enc[:S][None, :, :]

    assert out.shape == (B, S, D_MODEL)
    assert bool(jnp.all(jnp.isfinite(out)))
    assert bool(jnp.allclose(out, ref, atol=1e-6, rtol=1e-6))
    print("KERNEL_OK")
</pallas_src>

<mosaic_0001>
module attributes {stable_mosaic.version = 11 : i64} {
  func.func @_embed_kernel(%arg0: i32, %arg1: i32, %arg2: memref<32xi32, #tpu.memory_space<smem>>, %arg3: memref<64x128xf32, #tpu.memory_space<vmem>>, %arg4: memref<8x128xf32, #tpu.memory_space<vmem>>, %arg5: memref<1x8x128xf32, #tpu.memory_space<vmem>>) attributes {dimension_semantics = [#tpu.dimension_semantics<parallel>, #tpu.dimension_semantics<parallel>], iteration_bounds = array<i64: 2, 2>, scalar_prefetch = 1 : i64, scratch_operands = 0 : i64, tpu.core_type = #tpu.core_type<tc>, window_params = [{pipeline_mode = #tpu.pipeline_mode<synchronous>, transform_indices = @transform_0, window_bounds = array<i64: 64, 128>}, {transform_indices = @transform_1, window_bounds = array<i64: 8, 128>}, {transform_indices = @transform_2, window_bounds = array<i64: 1, 8, 128>}]} {
    %c16_i32 = arith.constant 16 : i32
    %0 = arith.muli %arg0, %c16_i32 : i32
    %c8_i32 = arith.constant 8 : i32
    %1 = arith.muli %arg1, %c8_i32 : i32
    %2 = arith.addi %0, %1 : i32
    %c0_i32 = arith.constant 0 : i32
    %3 = arith.addi %2, %c0_i32 : i32
    %4 = arith.index_cast %3 : i32 to index
    %5 = memref.load %arg2[%4] : memref<32xi32, #tpu.memory_space<smem>>
    %6 = arith.index_cast %5 : i32 to index
    %c0 = arith.constant 0 : index
    %7 = vector.load %arg3[%6, %c0] : memref<64x128xf32, #tpu.memory_space<vmem>>, vector<1x128xf32>
    %8 = arith.index_cast %c0_i32 : i32 to index
    %c0_0 = arith.constant 0 : index
    %9 = vector.load %arg4[%8, %c0_0] : memref<8x128xf32, #tpu.memory_space<vmem>>, vector<1x128xf32>
    %10 = arith.addf %7, %9 : vector<1x128xf32>
    %c0_1 = arith.constant 0 : index
    %11 = arith.index_cast %c0_i32 : i32 to index
    %c0_2 = arith.constant 0 : index
    %12 = vector.load %arg5[%c0_1, %11, %c0_2] : memref<1x8x128xf32, #tpu.memory_space<vmem>>, vector<1x1x128xf32>
    %13 = vector.shape_cast %12 : vector<1x1x128xf32> to vector<1x128xf32>
    %14 = vector.shape_cast %10 : vector<1x128xf32> to vector<1x1x128xf32>
    tpu.vector_store %arg5[%c0_1, %11, %c0_2], %14 {strides = array<i32>} : memref<1x8x128xf32, #tpu.memory_space<vmem>>, vector<1x1x128xf32>,
    %c1_i32 = arith.constant 1 : i32
    %15 = arith.addi %2, %c1_i32 : i32
    %16 = arith.index_cast %15 : i32 to index
    %17 = memref.load %arg2[%16] : memref<32xi32, #tpu.memory_space<smem>>
    %18 = arith.index_cast %17 : i32 to index
    %c0_3 = arith.constant 0 : index
    %19 = vector.load %arg3[%18, %c0_3] : memref<64x128xf32, #tpu.memory_space<vmem>>, vector<1x128xf32>
    %20 = arith.index_cast %c1_i32 : i32 to index
    %c0_4 = arith.constant 0 : index
    %21 = vector.load %arg4[%20, %c0_4] : memref<8x128xf32, #tpu.memory_space<vmem>>, vector<1x128xf32>
    %22 = arith.addf %19, %21 : vector<1x128xf32>
    %c0_5 = arith.constant 0 : index
    %23 = arith.index_cast %c1_i32 : i32 to index
    %c0_6 = arith.constant 0 : index
    %24 = vector.load %arg5[%c0_5, %23, %c0_6] : memref<1x8x128xf32, #tpu.memory_space<vmem>>, vector<1x1x128xf32>
    %25 = vector.shape_cast %24 : vector<1x1x128xf32> to vector<1x128xf32>
    %26 = vector.shape_cast %22 : vector<1x128xf32> to vector<1x1x128xf32>
    tpu.vector_store %arg5[%c0_5, %23, %c0_6], %26 {strides = array<i32>} : memref<1x8x128xf32, #tpu.memory_space<vmem>>, vector<1x1x128xf32>,
    %c2_i32 = arith.constant 2 : i32
    %27 = arith.addi %2, %c2_i32 : i32
    %28 = arith.index_cast %27 : i32 to index
    %29 = memref.load %arg2[%28] : memref<32xi32, #tpu.memory_space<smem>>
    %30 = arith.index_cast %29 : i32 to index
    %c0_7 = arith.constant 0 : index
    %31 = vector.load %arg3[%30, %c0_7] : memref<64x128xf32, #tpu.memory_space<vmem>>, vector<1x128xf32>
    %32 = arith.index_cast %c2_i32 : i32 to index
    %c0_8 = arith.constant 0 : index
    %33 = vector.load %arg4[%32, %c0_8] : memref<8x128xf32, #tpu.memory_space<vmem>>, vector<1x128xf32>
    %34 = arith.addf %31, %33 : vector<1x128xf32>
    %c0_9 = arith.constant 0 : index
    %35 = arith.index_cast %c2_i32 : i32 to index
    %c0_10 = arith.constant 0 : index
    %36 = vector.load %arg5[%c0_9, %35, %c0_10] : memref<1x8x128xf32, #tpu.memory_space<vmem>>, vector<1x1x128xf32>
    %37 = vector.shape_cast %36 : vector<1x1x128xf32> to vector<1x128xf32>
    %38 = vector.shape_cast %34 : vector<1x128xf32> to vector<1x1x128xf32>
    tpu.vector_store %arg5[%c0_9, %35, %c0_10], %38 {strides = array<i32>} : memref<1x8x128xf32, #tpu.memory_space<vmem>>, vector<1x1x128xf32>,
    %c3_i32 = arith.constant 3 : i32
    %39 = arith.addi %2, %c3_i32 : i32
    %40 = arith.index_cast %39 : i32 to index
    %41 = memref.load %arg2[%40] : memref<32xi32, #tpu.memory_space<smem>>
    %42 = arith.index_cast %41 : i32 to index
    %c0_11 = arith.constant 0 : index
    %43 = vector.load %arg3[%42, %c0_11] : memref<64x128xf32, #tpu.memory_space<vmem>>, vector<1x128xf32>
    %44 = arith.index_cast %c3_i32 : i32 to index
    %c0_12 = arith.constant 0 : index
    %45 = vector.load %arg4[%44, %c0_12] : memref<8x128xf32, #tpu.memory_space<vmem>>, vector<1x128xf32>
    %46 = arith.addf %43, %45 : vector<1x128xf32>
    %c0_13 = arith.constant 0 : index
    %47 = arith.index_cast %c3_i32 : i32 to index
    %c0_14 = arith.constant 0 : index
    %48 = vector.load %arg5[%c0_13, %47, %c0_14] : memref<1x8x128xf32, #tpu.memory_space<vmem>>, vector<1x1x128xf32>
    %49 = vector.shape_cast %48 : vector<1x1x128xf32> to vector<1x128xf32>
    %50 = vector.shape_cast %46 : vector<1x128xf32> to vector<1x1x128xf32>
    tpu.vector_store %arg5[%c0_13, %47, %c0_14], %50 {strides = array<i32>} : memref<1x8x128xf32, #tpu.memory_space<vmem>>, vector<1x1x128xf32>,
    %c4_i32 = arith.constant 4 : i32
    %51 = arith.addi %2, %c4_i32 : i32
    %52 = arith.index_cast %51 : i32 to index
    %53 = memref.load %arg2[%52] : memref<32xi32, #tpu.memory_space<smem>>
    %54 = arith.index_cast %53 : i32 to index
    %c0_15 = arith.constant 0 : index
    %55 = vector.load %arg3[%54, %c0_15] : memref<64x128xf32, #tpu.memory_space<vmem>>, vector<1x128xf32>
    %56 = arith.index_cast %c4_i32 : i32 to index
    %c0_16 = arith.constant 0 : index
    %57 = vector.load %arg4[%56, %c0_16] : memref<8x128xf32, #tpu.memory_space<vmem>>, vector<1x128xf32>
    %58 = arith.addf %55, %57 : vector<1x128xf32>
    %c0_17 = arith.constant 0 : index
    %59 = arith.index_cast %c4_i32 : i32 to index
    %c0_18 = arith.constant 0 : index
    %60 = vector.load %arg5[%c0_17, %59, %c0_18] : memref<1x8x128xf32, #tpu.memory_space<vmem>>, vector<1x1x128xf32>
    %61 = vector.shape_cast %60 : vector<1x1x128xf32> to vector<1x128xf32>
    %62 = vector.shape_cast %58 : vector<1x128xf32> to vector<1x1x128xf32>
    tpu.vector_store %arg5[%c0_17, %59, %c0_18], %62 {strides = array<i32>} : memref<1x8x128xf32, #tpu.memory_space<vmem>>, vector<1x1x128xf32>,
    %c5_i32 = arith.constant 5 : i32
    %63 = arith.addi %2, %c5_i32 : i32
    %64 = arith.index_cast %63 : i32 to index
    %65 = memref.load %arg2[%64] : memref<32xi32, #tpu.memory_space<smem>>
    %66 = arith.index_cast %65 : i32 to index
    %c0_19 = arith.constant 0 : index
    %67 = vector.load %arg3[%66, %c0_19] : memref<64x128xf32, #tpu.memory_space<vmem>>, vector<1x128xf32>
    %68 = arith.index_cast %c5_i32 : i32 to index
    %c0_20 = arith.constant 0 : index
    %69 = vector.load %arg4[%68, %c0_20] : memref<8x128xf32, #tpu.memory_space<vmem>>, vector<1x128xf32>
    %70 = arith.addf %67, %69 : vector<1x128xf32>
    %c0_21 = arith.constant 0 : index
    %71 = arith.index_cast %c5_i32 : i32 to index
    %c0_22 = arith.constant 0 : index
    %72 = vector.load %arg5[%c0_21, %71, %c0_22] : memref<1x8x128xf32, #tpu.memory_space<vmem>>, vector<1x1x128xf32>
    %73 = vector.shape_cast %72 : vector<1x1x128xf32> to vector<1x128xf32>
    %74 = vector.shape_cast %70 : vector<1x128xf32> to vector<1x1x128xf32>
    tpu.vector_store %arg5[%c0_21, %71, %c0_22], %74 {strides = array<i32>} : memref<1x8x128xf32, #tpu.memory_space<vmem>>, vector<1x1x128xf32>,
    %c6_i32 = arith.constant 6 : i32
    %75 = arith.addi %2, %c6_i32 : i32
    %76 = arith.index_cast %75 : i32 to index
    %77 = memref.load %arg2[%76] : memref<32xi32, #tpu.memory_space<smem>>
    %78 = arith.index_cast %77 : i32 to index
    %c0_23 = arith.constant 0 : index
    %79 = vector.load %arg3[%78, %c0_23] : memref<64x128xf32, #tpu.memory_space<vmem>>, vector<1x128xf32>
    %80 = arith.index_cast %c6_i32 : i32 to index
    %c0_24 = arith.constant 0 : index
    %81 = vector.load %arg4[%80, %c0_24] : memref<8x128xf32, #tpu.memory_space<vmem>>, vector<1x128xf32>
    %82 = arith.addf %79, %81 : vector<1x128xf32>
    %c0_25 = arith.constant 0 : index
    %83 = arith.index_cast %c6_i32 : i32 to index
    %c0_26 = arith.constant 0 : index
    %84 = vector.load %arg5[%c0_25, %83, %c0_26] : memref<1x8x128xf32, #tpu.memory_space<vmem>>, vector<1x1x128xf32>
    %85 = vector.shape_cast %84 : vector<1x1x128xf32> to vector<1x128xf32>
    %86 = vector.shape_cast %82 : vector<1x128xf32> to vector<1x1x128xf32>
    tpu.vector_store %arg5[%c0_25, %83, %c0_26], %86 {strides = array<i32>} : memref<1x8x128xf32, #tpu.memory_space<vmem>>, vector<1x1x128xf32>,
    %c7_i32 = arith.constant 7 : i32
    %87 = arith.addi %2, %c7_i32 : i32
    %88 = arith.index_cast %87 : i32 to index
    %89 = memref.load %arg2[%88] : memref<32xi32, #tpu.memory_space<smem>>
    %90 = arith.index_cast %89 : i32 to index
    %c0_27 = arith.constant 0 : index
    %91 = vector.load %arg3[%90, %c0_27] : memref<64x128xf32, #tpu.memory_space<vmem>>, vector<1x128xf32>
    %92 = arith.index_cast %c7_i32 : i32 to index
    %c0_28 = arith.constant 0 : index
    %93 = vector.load %arg4[%92, %c0_28] : memref<8x128xf32, #tpu.memory_space<vmem>>, vector<1x128xf32>
    %94 = arith.addf %91, %93 : vector<1x128xf32>
    %c0_29 = arith.constant 0 : index
    %95 = arith.index_cast %c7_i32 : i32 to index
    %c0_30 = arith.constant 0 : index
    %96 = vector.load %arg5[%c0_29, %95, %c0_30] : memref<1x8x128xf32, #tpu.memory_space<vmem>>, vector<1x1x128xf32>
    %97 = vector.shape_cast %96 : vector<1x1x128xf32> to vector<1x128xf32>
    %98 = vector.shape_cast %94 : vector<1x128xf32> to vector<1x1x128xf32>
    tpu.vector_store %arg5[%c0_29, %95, %c0_30], %98 {strides = array<i32>} : memref<1x8x128xf32, #tpu.memory_space<vmem>>, vector<1x1x128xf32>,
    %c8_i32_31 = arith.constant 8 : i32
    return
  }
  func.func @transform_0(%arg0: i32, %arg1: i32, %arg2: memref<32xi32, #tpu.memory_space<smem>>) -> (i32, i32) {
    %c0_i32 = arith.constant 0 : i32
    %c0_i32_0 = arith.constant 0 : i32
    %c0_i32_1 = arith.constant 0 : i32
    return %c0_i32, %c0_i32_0 : i32, i32
  }
  func.func @transform_1(%arg0: i32, %arg1: i32, %arg2: memref<32xi32, #tpu.memory_space<smem>>) -> (i32, i32) {
    %c0_i32 = arith.constant 0 : i32
    %c0_i32_0 = arith.constant 0 : i32
    return %arg1, %c0_i32 : i32, i32
  }
  func.func @transform_2(%arg0: i32, %arg1: i32, %arg2: memref<32xi32, #tpu.memory_space<smem>>) -> (i32, i32, i32) {
    %c0_i32 = arith.constant 0 : i32
    %c0_i32_0 = arith.constant 0 : i32
    return %arg0, %arg1, %c0_i32 : i32, i32, i32
  }
}

</mosaic_0001>

<llo_original>
// kernel: tpu_custom_call.1
$region0: #{tpu_custom_call.1}
  #allocation0 [shape = 'u32[]', space=smem, size = 0x4, offset = 0x4, fixed_abs, tag = 'smem constant byte address 0x4 - core index']
  #allocation1 [shape = 'u32[144,128]{1,0:T(1,128)}', space=vmem, size = 0x12000, scoped, tag = 'internal scratch']
  #allocation2 [shape = 's32[1]{0}', space=sflag, size = 0x4, scoped, tag = 'scoped memory for tpu_custom_call.1']
  #allocation3 [shape = 'u8[512]{0}', space=smem, size = 0x200, scoped, tag = 'prefetched SMEM operand 0']
  %s0 = inlined_call_operand.hbm [shape: s32[32], index: 0, kind: input, shape index: {}]
  %s1 = inlined_call_operand.hbm [shape: f32[64,128], index: 1, kind: input, shape index: {}]
  %s2 = inlined_call_operand.hbm [shape: f32[16,128], index: 2, kind: input, shape index: {}]
  %s3 = inlined_call_operand.hbm [shape: f32[2,16,128], index: 3, kind: output, shape index: {}]
  %s4 = sld [smem:[#allocation0]]
  $region49: #{tpu_custom_call.1} parent=0
    _
  %s6 = ssub.s32 1, %s4
  %s7 = scalar_select 0, %s6, %s4
  %9 = dma.hbm_to_smem %s0, 16, [#allocation3], [#allocation2]
  %10 = dma.done [#allocation2], 16
  %11 = sfence
  $region1: #{tpu_custom_call.1} parent=0
    #allocation4 [shape = 'u8[32768]{0}', space=vmem, size = 0x8000, scoped, tag = 'input window, operand 1, single buffered']
    #allocation5 [shape = 's32[2]{0}', space=sflag, size = 0x8, scoped, tag = 'scoped memory for tpu_custom_call.1']
    #allocation6 [shape = 's32[2]{0}', space=sflag, size = 0x8, scoped, tag = 'scoped memory for tpu_custom_call.1']
    #allocation7 [shape = 'u8[8192]{0}', space=vmem, size = 0x2000, scoped, tag = 'input window, operand 2']
    #allocation8 [shape = 's32[2]{0}', space=sflag, size = 0x8, scoped, tag = 'scoped memory for tpu_custom_call.1']
    #allocation9 [shape = 'u8[8192]{0}', space=vmem, size = 0x2000, scoped, tag = 'output window, operand 0']
    %12 = vsyncpa [#allocation5], 0
    %13 = vsyncpa [#allocation8], 0
    %s14 = scalar_lea.sflag [#allocation8], 1
    %15 = vsyncpa %s14, 0
    %16 = vsyncpa [#allocation6], 0
    %s17 = scalar_lea.sflag [#allocation6], 1
    %18 = vsyncpa %s17, 0
    loop: start=0, step=1, limit=6
    $region2: #{tpu_custom_call.1} parent=1 // loop_pre_header
      _
    $region3: #{tpu_custom_call.1} parent=1 // loop_header
      %s20 = sphi 0, %s24
      %p21 = scmp.ge.s32.totalorder %s20, 6
      %s27 = sphi 0, %s39
      %s28 = sphi 0, %s35
      %s29 = sphi 0, %s27
      %s30 = sphi 0, %s28
      %s31 = sphi 0, %s29
      %s32 = sphi 0, %s30
      %s40 = sphi 0, %s40
      %s42 = sphi 0, %s40
      %s43 = sphi 0, %s42
      %s57 = sphi 0, %s43
      %s63 = sphi 0, %s65
      %s66 = sphi 0, %s63
      %s67 = sphi 0, %s66
      %s83 = sphi 0, %s67
      %s91 = sphi 0, %s93
      %s94 = sphi 0, %s91
      %s95 = sphi 0, %s94
      %s111 = sphi 0, %s95
    $region4: #{tpu_custom_call.1} parent=1 // loop_header_branch
      %23 = sbr.rel (%p21) target = $region8
    $region5: #{tpu_custom_call.1} parent=1 // loop_body
      %s25 = ssub.s32 %s20, 1
      %s26 = ssub.s32 %s20, 2
      %s33 = sadd.s32 1, %s28
      %p34 = scmp.ge.s32.totalorder %s33, 2
      %s35 = scalar_select %p34, 0, %s33
      %s36 = sadd.s32 1, %s27
      %s37 = scalar_select %p34, %s36, %s27
      %p38 = scmp.ge.s32.totalorder %s37, 2
      %s39 = scalar_select %p38, 0, %s37
      %s41 = sadd.s32 %s40, 1
      %p44 = scmp.eq.s32.totalorder %s20, 3
      %p45 = scmp.ne.s32.totalorder %s40, %s42
      %p46 = scmp.eq.s32.totalorder %s20, 0
      %p47 = por %p45, %p46
      %p48 = scmp.ne.s32.totalorder %s40, %s42
      %p49 = scmp.eq.s32.totalorder %s25, 3
      %p50 = por %p48, %p49
      %p51 = scmp.ne.s32.totalorder %s42, %s43
      %p52 = scmp.eq.s32.totalorder %s25, 0
      %p53 = por %p51, %p52
      %p54 = scmp.ne.s32.totalorder %s42, %s43
      %p55 = scmp.eq.s32.totalorder %s26, 3
      %p56 = por %p54, %p55
      %p58 = scmp.ne.s32.totalorder %s43, %s57
      %p59 = scmp.eq.s32.totalorder %s26, 0
      %p60 = por %p58, %p59
      %s61 = ssub.s32 %s28, %s35
      %p62 = scmp.eq.s32.totalorder %s61, 0
      %s64 = sadd.s32 %s63, 1
      %s65 = scalar_select %p62, %s63, %s64
      %p68 = pneg %p62
      %p69 = scmp.eq.s32.totalorder %s20, 3
      %p70 = por %p68, %p69
      %p71 = scmp.ne.s32.totalorder %s63, %s66
      %p72 = scmp.eq.s32.totalorder %s20, 0
      %p73 = por %p71, %p72
      %p74 = scmp.ne.s32.totalorder %s63, %s66
      %p75 = scmp.eq.s32.totalorder %s25, 3
      %p76 = por %p74, %p75
      %p77 = scmp.ne.s32.totalorder %s66, %s67
      %p78 = scmp.eq.s32.totalorder %s25, 0
      %p79 = por %p77, %p78
      %p80 = scmp.ne.s32.totalorder %s66, %s67
      %p81 = scmp.eq.s32.totalorder %s26, 3
      %p82 = por %p80, %p81
      %p84 = scmp.ne.s32.totalorder %s67, %s83
      %p85 = scmp.eq.s32.totalorder %s26, 0
      %p86 = por %p84, %p85
      %s87 = ssub.s32 %s27, %s39
      %s88 = ssub.s32 %s28, %s35
      %s89 = sor.u32 %s87, %s88
      %p90 = scmp.eq.s32.totalorder %s89, 0
      %s92 = sadd.s32 %s91, 1
      %s93 = scalar_select %p90, %s91, %s92
      %p96 = pneg %p90
      %p97 = scmp.eq.s32.totalorder %s20, 3
      %p98 = por %p96, %p97
      %p99 = scmp.ne.s32.totalorder %s91, %s94
      %p100 = scmp.eq.s32.totalorder %s20, 0
      %p101 = por %p99, %p100
      %p102 = scmp.ne.s32.totalorder %s91, %s94
      %p103 = scmp.eq.s32.totalorder %s25, 3
      %p104 = por %p102, %p103
      %p105 = scmp.ne.s32.totalorder %s94, %s95
      %p106 = scmp.eq.s32.totalorder %s25, 0
      %p107 = por %p105, %p106
      %p108 = scmp.ne.s32.totalorder %s94, %s95
      %p109 = scmp.eq.s32.totalorder %s26, 3
      %p110 = por %p108, %p109
      %p112 = scmp.ne.s32.totalorder %s95, %s111
      %p113 = scmp.eq.s32.totalorder %s26, 0
      %p114 = por %p112, %p113
      %p115 = scmp.le.s32.totalorder 1, %s20
      %p116 = scmp.lt.s32.totalorder %s20, 5
      %p117 = pnand %p115, %p116
      %p118 = pneg %p117
      // Predicated region
      $region9: #{tpu_custom_call.1} parent=5 // pred_check
        _
      $region10: #{tpu_custom_call.1} parent=5 // pred_check_branch
        %120 = sbr.rel (%p117) target = $region12
      $region11: #{tpu_custom_call.1} parent=5 // pred_region
        %s121 = ssub.s32 %s20, 1
        // Predicated region
        $region13: #{tpu_custom_call.1} parent=11 // pred_check
          %p122 = pneg %p53
        $region14: #{tpu_custom_call.1} parent=11 // pred_check_branch
          %124 = sbr.rel (%p122) target = $region16
        $region15: #{tpu_custom_call.1} parent=11 // pred_region
          %s126 = ssub.s32 1024, 1024
          %127 = vsyncadd [#allocation5], %s126
          %s128 = sshll.u32 [#allocation4], 4
          %s129 = int_to_ptr.vmem [resolvable:$true] %s128
          %134 = dma.hbm_to_vmem [thread:$0]  %s1, 1024, %s129, [#allocation5], 128, 128, 8
        $region16: #{tpu_custom_call.1} parent=11 // pred_fallthru
          _
      $region12: #{tpu_custom_call.1} parent=5 // pred_fallthru
        _
      %p135 = scmp.lt.s32.totalorder %s20, 4
      // Predicated region
      $region17: #{tpu_custom_call.1} parent=5 // pred_check
        %p136 = pneg %p135
      $region18: #{tpu_custom_call.1} parent=5 // pred_check_branch
        %138 = sbr.rel (%p136) target = $region20
      $region19: #{tpu_custom_call.1} parent=5 // pred_region
        // Predicated region
        $region21: #{tpu_custom_call.1} parent=19 // pred_check
          %p139 = pneg %p73
        $region22: #{tpu_custom_call.1} parent=19 // pred_check_branch
          %141 = sbr.rel (%p139) target = $region24
        $region23: #{tpu_custom_call.1} parent=19 // pred_region
          %s142 = sand.u32 %s63, 1
          %s143 = scalar_lea.sflag [#allocation8], %s142
          %s144 = sand.u32 %s63, 1
          %s145 = smul.addr %s144, 8
          %s146 = scalar_lea.vmem [#allocation7], %s145
          %s148 = ssub.s32 128, 128
          %149 = vsyncadd %s143, %s148
          %s150 = smul.addr %s28, 128
          %s151 = scalar_lea.hbm %s2, %s150
          %s153 = sshll.u32 %s146, 4
          %s154 = int_to_ptr.vmem [resolvable:$true] %s153
          %156 = dma.hbm_to_vmem [thread:$0]  %s151, 128, %s154, %s143
        $region24: #{tpu_custom_call.1} parent=19 // pred_fallthru
          _
      $region20: #{tpu_custom_call.1} parent=5 // pred_fallthru
        _
      %p157 = scmp.le.s32.totalorder 1, %s20
      %p158 = scmp.lt.s32.totalorder %s20, 5
      %p159 = pnand %p157, %p158
      %p160 = pneg %p159
      // Predicated region
      $region25: #{tpu_custom_call.1} parent=5 // pred_check
        _
      $region26: #{tpu_custom_call.1} parent=5 // pred_check_branch
        %162 = sbr.rel (%p159) target = $region28
      $region27: #{tpu_custom_call.1} parent=5 // pred_region
        %s163 = ssub.s32 %s20, 1
        // Predicated region
        $region29: #{tpu_custom_call.1} parent=27 // pred_check
          %p164 = pneg %p53
        $region30: #{tpu_custom_call.1} parent=27 // pred_check_branch
          %166 = sbr.rel (%p164) target = $region32
        $region31: #{tpu_custom_call.1} parent=27 // pred_region
          %167 = dma.done [#allocation5], 1024
        $region32: #{tpu_custom_call.1} parent=27 // pred_fallthru
          _
        %s168 = sand.u32 %s66, 1
        %s169 = scalar_lea.sflag [#allocation8], %s168
        %s170 = sand.u32 %s66, 1
        %s171 = smul.addr %s170, 8
        %s172 = scalar_lea.vmem [#allocation7], %s171
        // Predicated region
        $region33: #{tpu_custom_call.1} parent=27 // pred_check
          %p173 = pneg %p79
        $region34: #{tpu_custom_call.1} parent=27 // pred_check_branch
          %175 = sbr.rel (%p173) target = $region36
        $region35: #{tpu_custom_call.1} parent=27 // pred_region
          %176 = dma.done %s169, 128
        $region36: #{tpu_custom_call.1} parent=27 // pred_fallthru
          _
        %p177 = pneg %p53
        %p178 = pneg %p50
        %s179 = sand.u32 %s66, 1
        %s180 = scalar_lea.sflag [#allocation8], %s179
        %s181 = sand.u32 %s66, 1
        %s182 = smul.addr %s181, 8
        %s183 = scalar_lea.vmem [#allocation7], %s182
        %p184 = pneg %p79
        %p185 = pneg %p76
        %p186 = pneg %p107
        %p187 = pneg %p104
        %s188 = sand.u32 %s94, 1
        %s189 = scalar_lea.sflag [#allocation6], %s188
        %s190 = sand.u32 %s94, 1
        %s191 = smul.addr %s190, 8
        %s192 = scalar_lea.vmem [#allocation9], %s191
        %s193 = smul.u32 %s29, 16
        %s194 = smul.u32 %s30, 8
        %s195 = sadd.s32 %s193, %s194
        %s196 = sld [smem:[#allocation3 + %s195]]
        %s197 = scalar_lea.vmem [#allocation4], %s196
        %v198 = vld [vmem:[%s197] sm:$0x1]
        %v199 = vld [vmem:[%s172] sm:$0x1]
        %v200 = vadd.f32 %v198, %v199
        %201 = vst [vmem:[%s192] sm:$0x1] %v200
        %s202 = sadd.s32 %s195, 1
        %s203 = sld [smem:[#allocation3 + %s202]]
        %s204 = scalar_lea.vmem [#allocation4], %s203
        %v205 = vld [vmem:[%s204] sm:$0x1]
        %v206 = vld [vmem:[%s172 + $0x1] sm:$0x1]
        %v207 = vadd.f32 %v205, %v206
        %208 = vst [vmem:[%s192 + $0x1] sm:$0x1] %v207
        %s209 = sadd.s32 %s195, 2
        %s210 = sld [smem:[#allocation3 + %s209]]
        %s211 = scalar_lea.vmem [#allocation4], %s210
        %v212 = vld [vmem:[%s211] sm:$0x1]
        %v213 = vld [vmem:[%s172 + $0x2] sm:$0x1]
        %v214 = vadd.f32 %v212, %v213
        %215 = vst [vmem:[%s192 + $0x2] sm:$0x1] %v214
        %s216 = sadd.s32 %s195, 3
        %s217 = sld [smem:[#allocation3 + %s216]]
        %s218 = scalar_lea.vmem [#allocation4], %s217
        %v219 = vld [vmem:[%s218] sm:$0x1]
        %v220 = vld [vmem:[%s172 + $0x3] sm:$0x1]
        %v221 = vadd.f32 %v219, %v220
        %222 = vst [vmem:[%s192 + $0x3] sm:$0x1] %v221
        %s223 = sadd.s32 %s195, 4
        %s224 = sld [smem:[#allocation3 + %s223]]
        %s225 = scalar_lea.vmem [#allocation4], %s224
        %v226 = vld [vmem:[%s225] sm:$0x1]
        %v227 = vld [vmem:[%s172 + $0x4] sm:$0x1]
        %v228 = vadd.f32 %v226, %v227
        %229 = vst [vmem:[%s192 + $0x4] sm:$0x1] %v228
        %s230 = sadd.s32 %s195, 5
        %s231 = sld [smem:[#allocation3 + %s230]]
        %s232 = scalar_lea.vmem [#allocation4], %s231
        %v233 = vld [vmem:[%s232] sm:$0x1]
        %v234 = vld [vmem:[%s172 + $0x5] sm:$0x1]
        %v235 = vadd.f32 %v233, %v234
        %236 = vst [vmem:[%s192 + $0x5] sm:$0x1] %v235
        %s237 = sadd.s32 %s195, 6
        %s238 = sld [smem:[#allocation3 + %s237]]
        %s239 = scalar_lea.vmem [#allocation4], %s238
        %v240 = vld [vmem:[%s239] sm:$0x1]
        %v241 = vld [vmem:[%s172 + $0x6] sm:$0x1]
        %v242 = vadd.f32 %v240, %v241
        %243 = vst [vmem:[%s192 + $0x6] sm:$0x1] %v242
        %s244 = sadd.s32 %s195, 7
        %s245 = sld [smem:[#allocation3 + %s244]]
        %s246 = scalar_lea.vmem [#allocation4], %s245
        %v247 = vld [vmem:[%s246] sm:$0x1]
        %v248 = vld [vmem:[%s172 + $0x7] sm:$0x1]
        %v249 = vadd.f32 %v247, %v248
        %250 = vst [vmem:[%s192 + $0x7] sm:$0x1] %v249
        %s251 = sand.u32 %s94, 1
        %s252 = scalar_lea.sflag [#allocation6], %s251
        %s253 = sand.u32 %s94, 1
        %s254 = smul.addr %s253, 8
        %s255 = scalar_lea.vmem [#allocation9], %s254
        // Predicated region
        $region37: #{tpu_custom_call.1} parent=27 // pred_check
          %p256 = pneg %p104
        $region38: #{tpu_custom_call.1} parent=27 // pred_check_branch
          %258 = sbr.rel (%p256) target = $region40
        $region39: #{tpu_custom_call.1} parent=27 // pred_region
          %s260 = ssub.s32 128, 128
          %261 = vsyncadd %s252, %s260
          %s262 = smul.addr %s29, 2
          %s263 = sadd.s32 %s30, %s262
          %s264 = smul.addr %s263, 128
          %s265 = scalar_lea.hbm %s3, %s264
          %s267 = sshll.u32 %s255, 4
          %s268 = int_to_ptr.vmem [resolvable:$true] %s267
          %270 = dma.vmem_to_hbm [thread:$0]  %s268, 128, %s265, %s252
        $region40: #{tpu_custom_call.1} parent=27 // pred_fallthru
          _
      $region28: #{tpu_custom_call.1} parent=5 // pred_fallthru
        _
      %p271 = scmp.le.s32.totalorder 2, %s20
      // Predicated region
      $region41: #{tpu_custom_call.1} parent=5 // pred_check
        %p272 = pneg %p271
      $region42: #{tpu_custom_call.1} parent=5 // pred_check_branch
        %274 = sbr.rel (%p272) target = $region44
      $region43: #{tpu_custom_call.1} parent=5 // pred_region
        %s275 = ssub.s32 %s20, 2
        // Predicated region
        $region45: #{tpu_custom_call.1} parent=43 // pred_check
          %p276 = pneg %p110
        $region46: #{tpu_custom_call.1} parent=43 // pred_check_branch
          %278 = sbr.rel (%p276) target = $region48
        $region47: #{tpu_custom_call.1} parent=43 // pred_region
          %s279 = sand.u32 %s95, 1
          %s280 = scalar_lea.sflag [#allocation6], %s279
          %s281 = sand.u32 %s95, 1
          %s282 = smul.addr %s281, 8
          %s283 = scalar_lea.vmem [#allocation9], %s282
          %284 = dma.done %s280, 128
        $region48: #{tpu_custom_call.1} parent=43 // pred_fallthru
          _
      $region44: #{tpu_custom_call.1} parent=5 // pred_fallthru
        _
    $region6: #{tpu_custom_call.1} parent=1 // loop_footer
      %s24 = sadd.s32 1, %s20
    $region7: #{tpu_custom_call.1} parent=1 // loop_footer_branch
      %19 = sbr.rel target = $region3
    $region8: #{tpu_custom_call.1} parent=1 // loop_exit
      _
    %285 = vsyncpa [#allocation5], 1
    %s286 = scalar_lea.sflag [#allocation5], 1
    %287 = vsyncpa %s286, 1
    %288 = vsyncpa [#allocation8], 1
    %s289 = scalar_lea.sflag [#allocation8], 1
    %290 = vsyncpa %s289, 1
    %291 = vsyncpa [#allocation6], 1
    %s292 = scalar_lea.sflag [#allocation6], 1
    %293 = vsyncpa %s292, 1

</llo_original>
